<compile_context>
chip_gen: v7x
topology: tpu7x:2x2x1
jax: 0.10.0
libtpu: 0.0.40
codegen_flags: <defaults>
</compile_context>

<pallas_src>
import numpy as np
import jax
import jax.numpy as jnp
from jax.experimental import pallas as pl
from jax.experimental.pallas import tpu as pltpu


def _round_up(v, m):
    return ((v + m - 1) // m) * m


# ----------------------------------------------------------------------------
# Kernel
# ----------------------------------------------------------------------------
def bag_kernel(x_ref, bag_ref, scale_ref, w1_ref, b1_ref, w2_ref, b2_ref,
               out_ref, acc_ref):
    n = pl.program_id(0)

    @pl.when(n == 0)
    def _init():
        acc_ref[...] = jnp.zeros_like(acc_ref)

    # prepNN: Linear + ReLU.  bf16 MXU inputs, f32 accumulation.
    h = jnp.dot(x_ref[...].astype(jnp.bfloat16), w1_ref[...],
                preferred_element_type=jnp.float32)
    h = jnp.maximum(h + b1_ref[...], 0.0)

    # Scale each instance row by 1/|bag| in f32 (reproduces torch.mean), so
    # the membership matrix below stays an exact 0/1 pattern in bf16.
    h = h * scale_ref[...]                                   # (TILE_N, Hp)*(TILE_N, 1)

    # On-chip (B_pad, TILE_N) one-hot membership block — no HBM seg matrix.
    b_pad = acc_ref.shape[0]
    tile_n = x_ref.shape[0]
    bag_rows = jax.lax.broadcasted_iota(jnp.int32, (b_pad, tile_n), 0)
    member = (bag_rows == bag_ref[...]).astype(jnp.bfloat16)  # bag_ref is (1, TILE_N)

    # aggregation_func (mean): accumulate per-bag sums of pre-scaled rows.
    acc_ref[...] += jnp.dot(member, h.astype(jnp.bfloat16),
                            preferred_element_type=jnp.float32)

    # afterNN: Linear on aggregated bag features, once on the last tile.
    @pl.when(n == pl.num_programs(0) - 1)
    def _finalize():
        out_ref[...] = (jnp.dot(acc_ref[...], w2_ref[...],
                                preferred_element_type=jnp.float32)
                        + b2_ref[...])


# ----------------------------------------------------------------------------
# Host-side bag metadata (vectorized; replaces the dense segment matrix)
# ----------------------------------------------------------------------------
def make_bag_metadata(ids_np):
    """Reproduce BagModel's bag ordering: sorted-unique ids re-ordered by
    first occurrence.  Returns (bag_row_per_instance, 1/count_per_instance,
    bags, num_bags)."""
    ids_np = np.asarray(ids_np)
    uniq, first_idx, inverse, counts = np.unique(
        ids_np, return_index=True, return_inverse=True, return_counts=True)
    perm = np.argsort(first_idx, kind="stable")      # == torch cat(...).sort()[1]
    bags = uniq[perm]
    rank = np.empty(len(uniq), dtype=np.int32)
    rank[perm] = np.arange(len(uniq), dtype=np.int32)
    bag_row = rank[inverse].astype(np.int32)                     # (N,)
    scale = (1.0 / counts[inverse]).astype(np.float32)           # (N,)
    return bag_row, scale, bags, len(uniq)


# ----------------------------------------------------------------------------
# Forward wrapper
# ----------------------------------------------------------------------------
def bag_model_forward(x, ids_np, w1, b1, w2, b2):
    """Equivalent of BagModel.forward for a 1-D `ids` row (returns `output`)."""
    bag_row, scale, _, n_bags = make_bag_metadata(ids_np)

    N, F = x.shape
    H = w1.shape[1]
    C = w2.shape[1]

    # Lane/sublane-aligned padded dims.
    f_pad = _round_up(F, 128)
    h_pad = _round_up(H, 128)
    c_pad = _round_up(C, 128)
    b_pad = _round_up(n_bags, 8)

    # Instance tile: multiple of 128, sized against a conservative per-stream
    # VMEM budget (safe for 64 MiB v7x VMEM and 128 MiB v5e/v6e).
    x_stream_budget = 16 << 20                       # double-buffered x tile bytes
    tile_cap = max(128, ((x_stream_budget // (2 * f_pad * 4)) // 128) * 128)
    tile_n = min(512, tile_cap)
    n_pad = _round_up(max(N, tile_n), tile_n)
    grid = (n_pad // tile_n,)

    # Zero/sentinel padding: padded instances get bag_row = -1 and scale = 0,
    # so they contribute nothing to any bag.
    xp = jnp.zeros((n_pad, f_pad), jnp.float32).at[:N, :F].set(x)
    bag_p = jnp.full((1, n_pad), -1, jnp.int32).at[0, :N].set(jnp.asarray(bag_row))
    scale_p = jnp.zeros((n_pad, 1), jnp.float32).at[:N, 0].set(jnp.asarray(scale))
    w1p = jnp.zeros((f_pad, h_pad), jnp.bfloat16).at[:F, :H].set(
        jnp.asarray(w1).astype(jnp.bfloat16))
    b1p = jnp.zeros((1, h_pad), jnp.float32).at[0, :H].set(jnp.asarray(b1).reshape(-1))
    w2p = jnp.zeros((h_pad, c_pad), jnp.float32).at[:H, :C].set(jnp.asarray(w2))
    b2p = jnp.zeros((1, c_pad), jnp.float32).at[0, :C].set(jnp.asarray(b2).reshape(-1))

    # Advisory cost estimate for XLA's scheduler.
    flops = (2 * n_pad * f_pad * h_pad          # prepNN Linear
             + 2 * b_pad * n_pad * h_pad        # segment-mean matmul
             + 2 * b_pad * h_pad * c_pad)       # afterNN Linear
    bytes_accessed = (xp.size * 4 + bag_p.size * 4 + scale_p.size * 4
                      + w1p.size * 2 + b1p.size * 4 + w2p.size * 4 + b2p.size * 4
                      + b_pad * c_pad * 4)
    cost = pl.CostEstimate(flops=flops, transcendentals=0,
                           bytes_accessed=bytes_accessed)

    # Explicit VMEM limit (double-buffered streams + resident weights + acc).
    vmem_need = (2 * tile_n * f_pad * 4                         # x tiles
                 + 2 * (tile_n * 4 + tile_n * 4)                # bag idx + scale tiles
                 + 2 * (f_pad * h_pad * 2 + h_pad * 4
                        + h_pad * c_pad * 4 + c_pad * 4)        # weights/biases
                 + 2 * b_pad * c_pad * 4                        # output block
                 + b_pad * h_pad * 4)                           # accumulator scratch
    vmem_limit = int(min(vmem_need * 2 + (4 << 20), 100 << 20))

    out = pl.pallas_call(
        bag_kernel,
        out_shape=jax.ShapeDtypeStruct((b_pad, c_pad), jnp.float32),
        grid_spec=pltpu.PrefetchScalarGridSpec(
            num_scalar_prefetch=0,
            grid=grid,
            in_specs=[
                pl.BlockSpec((tile_n, f_pad), lambda n: (n, 0)),   # x tile
                pl.BlockSpec((1, tile_n),     lambda n: (0, n)),   # bag-row ids tile
                pl.BlockSpec((tile_n, 1),     lambda n: (n, 0)),   # 1/count tile
                pl.BlockSpec((f_pad, h_pad),  lambda n: (0, 0)),   # w1 (resident)
                pl.BlockSpec((1, h_pad),      lambda n: (0, 0)),   # b1 (resident)
                pl.BlockSpec((h_pad, c_pad),  lambda n: (0, 0)),   # w2 (resident)
                pl.BlockSpec((1, c_pad),      lambda n: (0, 0)),   # b2 (resident)
            ],
            out_specs=pl.BlockSpec((b_pad, c_pad), lambda n: (0, 0)),
            scratch_shapes=[pltpu.VMEM((b_pad, h_pad), jnp.float32)],
        ),
        compiler_params=pltpu.CompilerParams(
            dimension_semantics=("arbitrary",),   # N is a reduction axis
            vmem_limit_bytes=vmem_limit,
        ),
        cost_estimate=cost,
    )(xp, bag_p, scale_p, w1p, b1p, w2p, b2p)

    return out[:n_bags, :C]


# ----------------------------------------------------------------------------
# f32 reference mirroring the torch code (loop over bags in first-appearance
# order, torch.mean aggregation).
# ----------------------------------------------------------------------------
def _reference(x, ids_np, w1, b1, w2, b2):
    ids_np = np.asarray(ids_np)
    _, _, bags, _ = make_bag_metadata(ids_np)
    h = jnp.maximum(x @ w1 + jnp.asarray(b1).reshape(1, -1), 0.0)
    rows = [jnp.mean(h[ids_np == b], axis=0) for b in bags]
    agg = jnp.stack(rows)
    return agg @ w2 + jnp.asarray(b2).reshape(1, -1)


if __name__ == "__main__":
    # Small shapes: 8 instances, 16 features, 32 hidden, 4 classes, 4 bags.
    N, F, H, C = 8, 16, 32, 4
    key = jax.random.PRNGKey(0)
    kx, k1, k2, k3, k4 = jax.random.split(key, 5)

    x = jax.random.normal(kx, (N, F), dtype=jnp.float32)
    # bag id per instance; first-appearance order differs from sorted order
    # to exercise BagModel's bag re-ordering logic.
    ids = np.array([3, 3, 1, 1, 1, 0, 0, 2], dtype=np.int32)

    # torch.nn.Linear-style uniform init bounds.
    w1 = jax.random.uniform(k1, (F, H), minval=-1.0 / np.sqrt(F), maxval=1.0 / np.sqrt(F))
    b1 = jax.random.uniform(k2, (1, H), minval=-1.0 / np.sqrt(F), maxval=1.0 / np.sqrt(F))
    w2 = jax.random.uniform(k3, (H, C), minval=-1.0 / np.sqrt(H), maxval=1.0 / np.sqrt(H))
    b2 = jax.random.uniform(k4, (1, C), minval=-1.0 / np.sqrt(H), maxval=1.0 / np.sqrt(H))

    out = jax.block_until_ready(bag_model_forward(x, ids, w1, b1, w2, b2))
    ref = jax.block_until_ready(_reference(x, ids, w1, b1, w2, b2))

    # bf16 MXU inputs + f32 accumulation → compare to the f32 reference at a
    # correspondingly looser tolerance.
    np.testing.assert_allclose(np.asarray(out), np.asarray(ref), rtol=2e-2, atol=2e-2)

    print("KERNEL_OK")
</pallas_src>

<mosaic_0001>
module attributes {stable_mosaic.version = 11 : i64} {
  func.func @bag_kernel(%arg0: i32, %arg1: memref<512x128xf32, #tpu.memory_space<vmem>>, %arg2: memref<1x512xi32, #tpu.memory_space<vmem>>, %arg3: memref<512x1xf32, #tpu.memory_space<vmem>>, %arg4: memref<128x128xbf16, #tpu.memory_space<vmem>>, %arg5: memref<1x128xf32, #tpu.memory_space<vmem>>, %arg6: memref<128x128xf32, #tpu.memory_space<vmem>>, %arg7: memref<1x128xf32, #tpu.memory_space<vmem>>, %arg8: memref<8x128xf32, #tpu.memory_space<vmem>>, %arg9: memref<8x128xf32, #tpu.memory_space<vmem>>) attributes {dimension_semantics = [#tpu.dimension_semantics<arbitrary>], iteration_bounds = array<i64: 1>, scalar_prefetch = 0 : i64, scratch_operands = 1 : i64, tpu.core_type = #tpu.core_type<tc>, window_params = [{transform_indices = @transform_0, window_bounds = array<i64: 512, 128>}, {transform_indices = @transform_1, window_bounds = array<i64: 1, 512>}, {transform_indices = @transform_2, window_bounds = array<i64: 512, 1>}, {pipeline_mode = #tpu.pipeline_mode<synchronous>, transform_indices = @transform_3, window_bounds = array<i64: 128, 128>}, {pipeline_mode = #tpu.pipeline_mode<synchronous>, transform_indices = @transform_4, window_bounds = array<i64: 1, 128>}, {pipeline_mode = #tpu.pipeline_mode<synchronous>, transform_indices = @transform_5, window_bounds = array<i64: 128, 128>}, {pipeline_mode = #tpu.pipeline_mode<synchronous>, transform_indices = @transform_6, window_bounds = array<i64: 1, 128>}, {pipeline_mode = #tpu.pipeline_mode<synchronous>, transform_indices = @transform_7, window_bounds = array<i64: 8, 128>}]} {
    %c0_i32 = arith.constant 0 : i32
    %0 = arith.cmpi eq, %arg0, %c0_i32 : i32
    %1 = arith.extui %0 : i1 to i32
    %c0_i32_0 = arith.constant 0 : i32
    %2 = arith.cmpi ne, %1, %c0_i32_0 : i32
    scf.if %2 {
      %cst_18 = arith.constant 0.000000e+00 : f32
      %30 = vector.broadcast %cst_18 : f32 to vector<8x128xf32>
      %c0_19 = arith.constant 0 : index
      %c0_20 = arith.constant 0 : index
      %31 = vector.load %arg9[%c0_19, %c0_20] : memref<8x128xf32, #tpu.memory_space<vmem>>, vector<8x128xf32>
      tpu.vector_store %arg9[%c0_19, %c0_20], %30 {strides = array<i32>} : memref<8x128xf32, #tpu.memory_space<vmem>>, vector<8x128xf32>,
    } else {
    }
    %c0 = arith.constant 0 : index
    %c0_1 = arith.constant 0 : index
    %3 = vector.load %arg1[%c0, %c0_1] : memref<512x128xf32, #tpu.memory_space<vmem>>, vector<512x128xf32>
    %4 = arith.truncf %3 : vector<512x128xf32> to vector<512x128xbf16>
    %c0_2 = arith.constant 0 : index
    %c0_3 = arith.constant 0 : index
    %5 = vector.load %arg4[%c0_2, %c0_3] : memref<128x128xbf16, #tpu.memory_space<vmem>>, vector<128x128xbf16>
    %cst = arith.constant dense<0.000000e+00> : vector<512x128xf32>
    %6 = tpu.matmul %4, %5, %cst {dimension_numbers = #tpu.dot_dimension_numbers<[1], [0], [0], [1], [0, 0, 1, 1], [], []>} : vector<512x128xbf16>, vector<128x128xbf16>, vector<512x128xf32> -> vector<512x128xf32>
    %c0_4 = arith.constant 0 : index
    %c0_5 = arith.constant 0 : index
    %7 = vector.load %arg5[%c0_4, %c0_5] : memref<1x128xf32, #tpu.memory_space<vmem>>, vector<1x128xf32>
    %8 = vector.broadcast %7 : vector<1x128xf32> to vector<512x128xf32>
    %9 = arith.addf %6, %8 : vector<512x128xf32>
    %cst_6 = arith.constant 0.000000e+00 : f32
    %10 = vector.broadcast %cst_6 : f32 to vector<512x128xf32>
    %11 = arith.maximumf %9, %10 : vector<512x128xf32>
    %c0_7 = arith.constant 0 : index
    %c0_8 = arith.constant 0 : index
    %12 = vector.load %arg3[%c0_7, %c0_8] : memref<512x1xf32, #tpu.memory_space<vmem>>, vector<512x1xf32>
    %13 = vector.broadcast %12 : vector<512x1xf32> to vector<512x128xf32>
    %14 = arith.mulf %11, %13 : vector<512x128xf32>
    %15 = tpu.iota {dimensions = array<i32: 0>} : vector<8x512xi32>
    %c0_9 = arith.constant 0 : index
    %c0_10 = arith.constant 0 : index
    %16 = vector.load %arg2[%c0_9, %c0_10] : memref<1x512xi32, #tpu.memory_space<vmem>>, vector<1x512xi32>
    %17 = vector.broadcast %16 : vector<1x512xi32> to vector<8x512xi32>
    %18 = arith.cmpi eq, %15, %17 : vector<8x512xi32>
    %19 = arith.extui %18 : vector<8x512xi1> to vector<8x512xi32>
    %20 = arith.sitofp %19 : vector<8x512xi32> to vector<8x512xf32>
    %21 = arith.truncf %20 : vector<8x512xf32> to vector<8x512xbf16>
    %c0_11 = arith.constant 0 : index
    %c0_12 = arith.constant 0 : index
    %22 = vector.load %arg9[%c0_11, %c0_12] : memref<8x128xf32, #tpu.memory_space<vmem>>, vector<8x128xf32>
    %23 = arith.truncf %14 : vector<512x128xf32> to vector<512x128xbf16>
    %cst_13 = arith.constant dense<0.000000e+00> : vector<8x128xf32>
    %24 = tpu.matmul %21, %23, %cst_13 {dimension_numbers = #tpu.dot_dimension_numbers<[1], [0], [0], [1], [0, 0, 1, 1], [], []>} : vector<8x512xbf16>, vector<512x128xbf16>, vector<8x128xf32> -> vector<8x128xf32>
    %25 = arith.addf %22, %24 : vector<8x128xf32>
    %c0_14 = arith.constant 0 : index
    %c0_15 = arith.constant 0 : index
    %26 = vector.load %arg9[%c0_14, %c0_15] : memref<8x128xf32, #tpu.memory_space<vmem>>, vector<8x128xf32>
    tpu.vector_store %arg9[%c0_14, %c0_15], %25 {strides = array<i32>} : memref<8x128xf32, #tpu.memory_space<vmem>>, vector<8x128xf32>,
    %c0_i32_16 = arith.constant 0 : i32
    %27 = arith.cmpi eq, %arg0, %c0_i32_16 : i32
    %28 = arith.extui %27 : i1 to i32
    %c0_i32_17 = arith.constant 0 : i32
    %29 = arith.cmpi ne, %28, %c0_i32_17 : i32
    scf.if %29 {
      %c0_18 = arith.constant 0 : index
      %c0_19 = arith.constant 0 : index
      %30 = vector.load %arg9[%c0_18, %c0_19] : memref<8x128xf32, #tpu.memory_space<vmem>>, vector<8x128xf32>
      %c0_20 = arith.constant 0 : index
      %c0_21 = arith.constant 0 : index
      %31 = vector.load %arg6[%c0_20, %c0_21] : memref<128x128xf32, #tpu.memory_space<vmem>>, vector<128x128xf32>
      %cst_22 = arith.constant dense<0.000000e+00> : vector<8x128xf32>
      %32 = tpu.matmul %30, %31, %cst_22 {dimension_numbers = #tpu.dot_dimension_numbers<[1], [0], [0], [1], [0, 0, 1, 1], [], []>} : vector<8x128xf32>, vector<128x128xf32>, vector<8x128xf32> -> vector<8x128xf32>
      %c0_23 = arith.constant 0 : index
      %c0_24 = arith.constant 0 : index
      %33 = vector.load %arg7[%c0_23, %c0_24] : memref<1x128xf32, #tpu.memory_space<vmem>>, vector<1x128xf32>
      %34 = vector.broadcast %33 : vector<1x128xf32> to vector<8x128xf32>
      %35 = arith.addf %32, %34 : vector<8x128xf32>
      %c0_25 = arith.constant 0 : index
      %c0_26 = arith.constant 0 : index
      %36 = vector.load %arg8[%c0_25, %c0_26] : memref<8x128xf32, #tpu.memory_space<vmem>>, vector<8x128xf32>
      tpu.vector_store %arg8[%c0_25, %c0_26], %35 {strides = array<i32>} : memref<8x128xf32, #tpu.memory_space<vmem>>, vector<8x128xf32>,
    } else {
    }
    return
  }
  func.func @transform_0(%arg0: i32) -> (i32, i32) {
    %c0_i32 = arith.constant 0 : i32
    %c0_i32_0 = arith.constant 0 : i32
    return %arg0, %c0_i32 : i32, i32
  }
  func.func @transform_1(%arg0: i32) -> (i32, i32) {
    %c0_i32 = arith.constant 0 : i32
    %c0_i32_0 = arith.constant 0 : i32
    return %c0_i32, %arg0 : i32, i32
  }
  func.func @transform_2(%arg0: i32) -> (i32, i32) {
    %c0_i32 = arith.constant 0 : i32
    %c0_i32_0 = arith.constant 0 : i32
    return %arg0, %c0_i32 : i32, i32
  }
  func.func @transform_3(%arg0: i32) -> (i32, i32) {
    %c0_i32 = arith.constant 0 : i32
    %c0_i32_0 = arith.constant 0 : i32
    %c0_i32_1 = arith.constant 0 : i32
    return %c0_i32, %c0_i32_0 : i32, i32
  }
  func.func @transform_4(%arg0: i32) -> (i32, i32) {
    %c0_i32 = arith.constant 0 : i32
    %c0_i32_0 = arith.constant 0 : i32
    %c0_i32_1 = arith.constant 0 : i32
    return %c0_i32, %c0_i32_0 : i32, i32
  }
  func.func @transform_5(%arg0: i32) -> (i32, i32) {
    %c0_i32 = arith.constant 0 : i32
    %c0_i32_0 = arith.constant 0 : i32
    %c0_i32_1 = arith.constant 0 : i32
    return %c0_i32, %c0_i32_0 : i32, i32
  }
  func.func @transform_6(%arg0: i32) -> (i32, i32) {
    %c0_i32 = arith.constant 0 : i32
    %c0_i32_0 = arith.constant 0 : i32
    %c0_i32_1 = arith.constant 0 : i32
    return %c0_i32, %c0_i32_0 : i32, i32
  }
  func.func @transform_7(%arg0: i32) -> (i32, i32) {
    %c0_i32 = arith.constant 0 : i32
    %c0_i32_0 = arith.constant 0 : i32
    %c0_i32_1 = arith.constant 0 : i32
    return %c0_i32, %c0_i32_0 : i32, i32
  }
}

</mosaic_0001>

<llo_original>
// kernel: tpu_custom_call.1
$region0: #{tpu_custom_call.1}
  #allocation0 [shape = 'u32[]', space=smem, size = 0x4, offset = 0x4, fixed_abs, tag = 'smem constant byte address 0x4 - core index']
  #allocation1 [shape = 'u32[144,128]{1,0:T(1,128)}', space=vmem, size = 0x12000, scoped, tag = 'internal scratch']
  #allocation2 [shape = 'f32[8,128]{1,0:T(8,128)}', space=vmem, size = 0x1000, scoped, tag = 'scratch operand']
  %s0 = inlined_call_operand.vmem [shape: f32[512,128], index: 0, kind: input, shape index: {}]
  %s1 = inlined_call_operand.vmem [shape: s32[1,512], index: 1, kind: input, shape index: {}]
  %s2 = inlined_call_operand.vmem [shape: f32[512,1], index: 2, kind: input, shape index: {}]
  %s3 = inlined_call_operand.hbm [shape: bf16[128,128], index: 3, kind: input, shape index: {}]
  %s4 = inlined_call_operand.vmem [shape: f32[1,128], index: 4, kind: input, shape index: {}]
  %s5 = inlined_call_operand.hbm [shape: f32[128,128], index: 5, kind: input, shape index: {}]
  %s6 = inlined_call_operand.vmem [shape: f32[1,128], index: 6, kind: input, shape index: {}]
  %s7 = inlined_call_operand.hbm [shape: f32[8,128], index: 7, kind: output, shape index: {}]
  %s8 = sld [smem:[#allocation0]]
  $region54: #{tpu_custom_call.1} parent=0
    _
  %s10 = ssub.s32 1, %s8
  %s11 = scalar_select 0, %s10, %s8
  $region1: #{tpu_custom_call.1} parent=0
    #allocation3 [shape = 'u8[32768]{0}', space=vmem, size = 0x8000, scoped, tag = 'input window, operand 3, single buffered']
    #allocation4 [shape = 's32[1]{0}', space=sflag, size = 0x4, scoped, tag = 'scoped memory for tpu_custom_call.1']
    #allocation5 [shape = 's32[1]{0}', space=sflag, size = 0x4, scoped, tag = 'scoped memory for tpu_custom_call.1']
    #allocation6 [shape = 'u8[65536]{0}', space=vmem, size = 0x10000, scoped, tag = 'input window, operand 5, single buffered']
    #allocation7 [shape = 's32[1]{0}', space=sflag, size = 0x4, scoped, tag = 'scoped memory for tpu_custom_call.1']
    #allocation8 [shape = 'u8[4096]{0}', space=vmem, size = 0x1000, scoped, tag = 'output window, operand 0, single buffered']
    %12 = vsyncpa [#allocation4], 0
    %13 = vsyncpa [#allocation7], 0
    %14 = vsyncpa [#allocation5], 0
    // Predicated region
    $region2: #{tpu_custom_call.1} parent=1 // pred_check
      _
    $region3: #{tpu_custom_call.1} parent=1 // pred_check_branch
      %16 = sbr.rel (0) target = $region5
    $region4: #{tpu_custom_call.1} parent=1 // pred_region
      _
    $region5: #{tpu_custom_call.1} parent=1 // pred_fallthru
      _
    // Predicated region
    $region6: #{tpu_custom_call.1} parent=1 // pred_check
      _
    $region7: #{tpu_custom_call.1} parent=1 // pred_check_branch
      %18 = sbr.rel (0) target = $region9
    $region8: #{tpu_custom_call.1} parent=1 // pred_region
      _
    $region9: #{tpu_custom_call.1} parent=1 // pred_fallthru
      _
    // Predicated region
    $region10: #{tpu_custom_call.1} parent=1 // pred_check
      _
    $region11: #{tpu_custom_call.1} parent=1 // pred_check_branch
      %20 = sbr.rel (0) target = $region13
    $region12: #{tpu_custom_call.1} parent=1 // pred_region
      _
    $region13: #{tpu_custom_call.1} parent=1 // pred_fallthru
      _
    // Predicated region
    $region14: #{tpu_custom_call.1} parent=1 // pred_check
      _
    $region15: #{tpu_custom_call.1} parent=1 // pred_check_branch
      %22 = sbr.rel (0) target = $region17
    $region16: #{tpu_custom_call.1} parent=1 // pred_region
      %s24 = ssub.s32 1024, 1024
      %25 = vsyncadd [#allocation4], %s24
      %s26 = sshll.u32 [#allocation3], 4
      %s27 = int_to_ptr.vmem [resolvable:$true] %s26
      %32 = dma.hbm_to_vmem [thread:$0]  %s3, 1024, %s27, [#allocation4], 64, 64, 4
    $region17: #{tpu_custom_call.1} parent=1 // pred_fallthru
      _
    // Predicated region
    $region18: #{tpu_custom_call.1} parent=1 // pred_check
      _
    $region19: #{tpu_custom_call.1} parent=1 // pred_check_branch
      %34 = sbr.rel (0) target = $region21
    $region20: #{tpu_custom_call.1} parent=1 // pred_region
      _
    $region21: #{tpu_custom_call.1} parent=1 // pred_fallthru
      _
    // Predicated region
    $region22: #{tpu_custom_call.1} parent=1 // pred_check
      _
    $region23: #{tpu_custom_call.1} parent=1 // pred_check_branch
      %36 = sbr.rel (0) target = $region25
    $region24: #{tpu_custom_call.1} parent=1 // pred_region
      %s38 = ssub.s32 2048, 2048
      %39 = vsyncadd [#allocation7], %s38
      %s40 = sshll.u32 [#allocation6], 4
      %s41 = int_to_ptr.vmem [resolvable:$true] %s40
      %46 = dma.hbm_to_vmem [thread:$0]  %s5, 2048, %s41, [#allocation7], 128, 128, 8
    $region25: #{tpu_custom_call.1} parent=1 // pred_fallthru
      _
    // Predicated region
    $region26: #{tpu_custom_call.1} parent=1 // pred_check
      _
    $region27: #{tpu_custom_call.1} parent=1 // pred_check_branch
      %48 = sbr.rel (0) target = $region29
    $region28: #{tpu_custom_call.1} parent=1 // pred_region
      _
    $region29: #{tpu_custom_call.1} parent=1 // pred_fallthru
      _
    // Predicated region
    $region30: #{tpu_custom_call.1} parent=1 // pred_check
      _
    $region31: #{tpu_custom_call.1} parent=1 // pred_check_branch
      %50 = sbr.rel (0) target = $region33
    $region32: #{tpu_custom_call.1} parent=1 // pred_region
      %51 = dma.done [#allocation4], 1024
    $region33: #{tpu_custom_call.1} parent=1 // pred_fallthru
      _
    // Predicated region
    $region34: #{tpu_custom_call.1} parent=1 // pred_check
      _
    $region35: #{tpu_custom_call.1} parent=1 // pred_check_branch
      %53 = sbr.rel (0) target = $region37
    $region36: #{tpu_custom_call.1} parent=1 // pred_region
      %54 = dma.done [#allocation7], 2048
    $region37: #{tpu_custom_call.1} parent=1 // pred_fallthru
      _
    %p56 = scmp.eq.s32.totalorder 0, 0
    // Predicated region
    $region38: #{tpu_custom_call.1} parent=1 // pred_check
      %p57 = pneg %p56
    $region39: #{tpu_custom_call.1} parent=1 // pred_check_branch
      %59 = sbr.rel (%p57) target = $region41
    $region40: #{tpu_custom_call.1} parent=1 // pred_region
      %60 = vst [vmem:[#allocation2] sm:$0xff] 0.0
    $region41: #{tpu_custom_call.1} parent=1 // pred_fallthru
      _
    %v61 = vld [vmem:[%s0] sm:$0xff]
    %v62 = vld [vmem:[%s0 + $0x8] sm:$0xff]
    %v63 = vld [vmem:[%s0 + $0x10] sm:$0xff]
    %v64 = vld [vmem:[%s0 + $0x18] sm:$0xff]
    %v65 = vld [vmem:[%s0 + $0x20] sm:$0xff]
    %v66 = vld [vmem:[%s0 + $0x28] sm:$0xff]
    %v67 = vld [vmem:[%s0 + $0x30] sm:$0xff]
    %v68 = vld [vmem:[%s0 + $0x38] sm:$0xff]
    %v69 = vld [vmem:[%s0 + $0x40] sm:$0xff]
    %v70 = vld [vmem:[%s0 + $0x48] sm:$0xff]
    %v71 = vld [vmem:[%s0 + $0x50] sm:$0xff]
    %v72 = vld [vmem:[%s0 + $0x58] sm:$0xff]
    %v73 = vld [vmem:[%s0 + $0x60] sm:$0xff]
    %v74 = vld [vmem:[%s0 + $0x68] sm:$0xff]
    %v75 = vld [vmem:[%s0 + $0x70] sm:$0xff]
    %v76 = vld [vmem:[%s0 + $0x78] sm:$0xff]
    %v77 = vld [vmem:[%s0 + $0x80] sm:$0xff]
    %v78 = vld [vmem:[%s0 + $0x88] sm:$0xff]
    %v79 = vld [vmem:[%s0 + $0x90] sm:$0xff]
    %v80 = vld [vmem:[%s0 + $0x98] sm:$0xff]
    %v81 = vld [vmem:[%s0 + $0xa0] sm:$0xff]
    %v82 = vld [vmem:[%s0 + $0xa8] sm:$0xff]
    %v83 = vld [vmem:[%s0 + $0xb0] sm:$0xff]
    %v84 = vld [vmem:[%s0 + $0xb8] sm:$0xff]
    %v85 = vld [vmem:[%s0 + $0xc0] sm:$0xff]
    %v86 = vld [vmem:[%s0 + $0xc8] sm:$0xff]
    %v87 = vld [vmem:[%s0 + $0xd0] sm:$0xff]
    %v88 = vld [vmem:[%s0 + $0xd8] sm:$0xff]
    %v89 = vld [vmem:[%s0 + $0xe0] sm:$0xff]
    %v90 = vld [vmem:[%s0 + $0xe8] sm:$0xff]
    %v91 = vld [vmem:[%s0 + $0xf0] sm:$0xff]
    %v92 = vld [vmem:[%s0 + $0xf8] sm:$0xff]
    %v93 = vld [vmem:[%s0 + $0x100] sm:$0xff]
    %v94 = vld [vmem:[%s0 + $0x108] sm:$0xff]
    %v95 = vld [vmem:[%s0 + $0x110] sm:$0xff]
    %v96 = vld [vmem:[%s0 + $0x118] sm:$0xff]
    %v97 = vld [vmem:[%s0 + $0x120] sm:$0xff]
    %v98 = vld [vmem:[%s0 + $0x128] sm:$0xff]
    %v99 = vld [vmem:[%s0 + $0x130] sm:$0xff]
    %v100 = vld [vmem:[%s0 + $0x138] sm:$0xff]
    %v101 = vld [vmem:[%s0 + $0x140] sm:$0xff]
    %v102 = vld [vmem:[%s0 + $0x148] sm:$0xff]
    %v103 = vld [vmem:[%s0 + $0x150] sm:$0xff]
    %v104 = vld [vmem:[%s0 + $0x158] sm:$0xff]
    %v105 = vld [vmem:[%s0 + $0x160] sm:$0xff]
    %v106 = vld [vmem:[%s0 + $0x168] sm:$0xff]
    %v107 = vld [vmem:[%s0 + $0x170] sm:$0xff]
    %v108 = vld [vmem:[%s0 + $0x178] sm:$0xff]
    %v109 = vld [vmem:[%s0 + $0x180] sm:$0xff]
    %v110 = vld [vmem:[%s0 + $0x188] sm:$0xff]
    %v111 = vld [vmem:[%s0 + $0x190] sm:$0xff]
    %v112 = vld [vmem:[%s0 + $0x198] sm:$0xff]
    %v113 = vld [vmem:[%s0 + $0x1a0] sm:$0xff]
    %v114 = vld [vmem:[%s0 + $0x1a8] sm:$0xff]
    %v115 = vld [vmem:[%s0 + $0x1b0] sm:$0xff]
    %v116 = vld [vmem:[%s0 + $0x1b8] sm:$0xff]
    %v117 = vld [vmem:[%s0 + $0x1c0] sm:$0xff]
    %v118 = vld [vmem:[%s0 + $0x1c8] sm:$0xff]
    %v119 = vld [vmem:[%s0 + $0x1d0] sm:$0xff]
    %v120 = vld [vmem:[%s0 + $0x1d8] sm:$0xff]
    %v121 = vld [vmem:[%s0 + $0x1e0] sm:$0xff]
    %v122 = vld [vmem:[%s0 + $0x1e8] sm:$0xff]
    %v123 = vld [vmem:[%s0 + $0x1f0] sm:$0xff]
    %v124 = vld [vmem:[%s0 + $0x1f8] sm:$0xff]
    %v125 = vpack.c.bf16 %v62, %v61
    %v126 = vpack.c.bf16 %v64, %v63
    %v127 = vpack.c.bf16 %v66, %v65
    %v128 = vpack.c.bf16 %v68, %v67
    %v129 = vpack.c.bf16 %v70, %v69
    %v130 = vpack.c.bf16 %v72, %v71
    %v131 = vpack.c.bf16 %v74, %v73
    %v132 = vpack.c.bf16 %v76, %v75
    %v133 = vpack.c.bf16 %v78, %v77
    %v134 = vpack.c.bf16 %v80, %v79
    %v135 = vpack.c.bf16 %v82, %v81
    %v136 = vpack.c.bf16 %v84, %v83
    %v137 = vpack.c.bf16 %v86, %v85
    %v138 = vpack.c.bf16 %v88, %v87
    %v139 = vpack.c.bf16 %v90, %v89
    %v140 = vpack.c.bf16 %v92, %v91
    %v141 = vpack.c.bf16 %v94, %v93
    %v142 = vpack.c.bf16 %v96, %v95
    %v143 = vpack.c.bf16 %v98, %v97
    %v144 = vpack.c.bf16 %v100, %v99
    %v145 = vpack.c.bf16 %v102, %v101
    %v146 = vpack.c.bf16 %v104, %v103
    %v147 = vpack.c.bf16 %v106, %v105
    %v148 = vpack.c.bf16 %v108, %v107
    %v149 = vpack.c.bf16 %v110, %v109
    %v150 = vpack.c.bf16 %v112, %v111
    %v151 = vpack.c.bf16 %v114, %v113
    %v152 = vpack.c.bf16 %v116, %v115
    %v153 = vpack.c.bf16 %v118, %v117
    %v154 = vpack.c.bf16 %v120, %v119
    %v155 = vpack.c.bf16 %v122, %v121
    %v156 = vpack.c.bf16 %v124, %v123
    %v157 = vld [vmem:[#allocation3] sm:$0xf]
    %v158 = vld [vmem:[#allocation3 + $0x4] sm:$0xf]
    %v159 = vld [vmem:[#allocation3 + $0x8] sm:$0xf]
    %v160 = vld [vmem:[#allocation3 + $0xc] sm:$0xf]
    %v161 = vld [vmem:[#allocation3 + $0x10] sm:$0xf]
    %v162 = vld [vmem:[#allocation3 + $0x14] sm:$0xf]
    %v163 = vld [vmem:[#allocation3 + $0x18] sm:$0xf]
    %v164 = vld [vmem:[#allocation3 + $0x1c] sm:$0xf]
    %v165 = vld [vmem:[#allocation3 + $0x20] sm:$0xf]
    %v166 = vld [vmem:[#allocation3 + $0x24] sm:$0xf]
    %v167 = vld [vmem:[#allocation3 + $0x28] sm:$0xf]
    %v168 = vld [vmem:[#allocation3 + $0x2c] sm:$0xf]
    %v169 = vld [vmem:[#allocation3 + $0x30] sm:$0xf]
    %v170 = vld [vmem:[#allocation3 + $0x34] sm:$0xf]
    %v171 = vld [vmem:[#allocation3 + $0x38] sm:$0xf]
    %v172 = vld [vmem:[#allocation3 + $0x3c] sm:$0xf]
    %v173 = vld [vmem:[%s4] sm:$0x1]
    %v175 = vlaneseq
    %v176 = vshrl.u32 %v175, 7
    %v177 = vsub.s32 0, %v176
    %v178 = vrot.slane %v173, %v177
    %v196 = vunpack.c.l.b16 %v157
    %v197 = vunpack.c.l.b16 %v158
    %v198 = vunpack.c.l.b16 %v159
    %v199 = vunpack.c.l.b16 %v160
    %v200 = vunpack.c.l.b16 %v161
    %v201 = vunpack.c.l.b16 %v162
    %v202 = vunpack.c.l.b16 %v163
    %v203 = vunpack.c.l.b16 %v164
    %v204 = vunpack.c.l.b16 %v165
    %v205 = vunpack.c.l.b16 %v166
    %v206 = vunpack.c.l.b16 %v167
    %v207 = vunpack.c.l.b16 %v168
    %v208 = vunpack.c.l.b16 %v169
    %v209 = vunpack.c.l.b16 %v170
    %v210 = vunpack.c.l.b16 %v171
    %v211 = vunpack.c.l.b16 %v172
    %v212 = vpack.c.b16 %v197, %v196
    %v213 = vpack.c.b16 %v199, %v198
    %v214 = vpack.c.b16 %v201, %v200
    %v215 = vpack.c.b16 %v203, %v202
    %v216 = vpack.c.b16 %v205, %v204
    %v217 = vpack.c.b16 %v207, %v206
    %v218 = vpack.c.b16 %v209, %v208
    %v219 = vpack.c.b16 %v211, %v210
    %228 = vmatprep.subr.bf16.mxu0 0
    %229 = vmatpush1.bf16.msra.mxu0 %v212
    %230 = vmatprep.subr.bf16.mxu0 0
    %231 = vmatpush1.bf16.msra.mxu0 %v213
    %232 = vmatprep.subr.bf16.mxu0 0
    %233 = vmatpush1.bf16.msra.mxu0 %v214
    %234 = vmatprep.subr.bf16.mxu0 0
    %235 = vmatpush1.bf16.msra.mxu0 %v215
    %236 = vmatprep.subr.bf16.mxu0 0
    %237 = vmatpush1.bf16.msra.mxu0 %v216
    %238 = vmatprep.subr.bf16.mxu0 0
    %239 = vmatpush1.bf16.msra.mxu0 %v217
    %240 = vmatprep.subr.bf16.mxu0 0
    %241 = vmatpush1.bf16.msra.mxu0 %v218
    %242 = vmatprep.subr.bf16.mxu0 0
    %243 = vmatpush1.bf16.msra.mxu0 %v219
    %244 = vmatprep.subr.bf16.mxu0 0
    %245 = vmatpush1.bf16.msra.mxu0 0
    %246 = vmatprep.subr.bf16.mxu0 0
    %247 = vmatpush1.bf16.msra.mxu0 0
    %248 = vmatprep.subr.bf16.mxu0 0
    %249 = vmatpush1.bf16.msra.mxu0 0
    %250 = vmatprep.subr.bf16.mxu0 0
    %251 = vmatpush1.bf16.msra.mxu0 0
    %252 = vmatprep.subr.bf16.mxu0 0
    %253 = vmatpush1.bf16.msra.mxu0 0
    %254 = vmatprep.subr.bf16.mxu0 0
    %255 = vmatpush1.bf16.msra.mxu0 0
    %256 = vmatprep.subr.bf16.mxu0 0
    %257 = vmatpush1.bf16.msra.mxu0 0
    %258 = vmatprep.subr.bf16.mxu0 0
    %259 = vmatpush1.bf16.msra.mxu0 0
    %260 = vmatprep.mubr.bf16.mxu0 0
    %261 = vmatmul.mubr.bf16.gmra.mrb[0].mxu0 %v125
    %v262 = vpop.f32.mrb[0].mxu0
    %v263 = vadd.f32 %v178, %v262
    %v264 = vpop.f32.mrb[0].mxu0
    %v265 = vpop.f32.mrb[0].mxu0
    %v266 = vadd.f32 %v178, %v265
    %v267 = vpop.f32.mrb[0].mxu0
    %268 = vmatprep.mubr.bf16.mxu0 0
    %269 = vmatmul.mubr.bf16.gmra.mrb[0].mxu0 %v126
    %v270 = vpop.f32.mrb[0].mxu0
    %v271 = vadd.f32 %v178, %v270
    %v272 = vpop.f32.mrb[0].mxu0
    %v273 = vpop.f32.mrb[0].mxu0
    %v274 = vadd.f32 %v178, %v273
    %v275 = vpop.f32.mrb[0].mxu0
    %276 = vmatprep.mubr.bf16.mxu0 0
    %277 = vmatmul.mubr.bf16.gmra.mrb[0].mxu0 %v127
    %v278 = vpop.f32.mrb[0].mxu0
    %v279 = vadd.f32 %v178, %v278
    %v280 = vpop.f32.mrb[0].mxu0
    %v281 = vpop.f32.mrb[0].mxu0
    %v282 = vadd.f32 %v178, %v281
    %v283 = vpop.f32.mrb[0].mxu0
    %284 = vmatprep.mubr.bf16.mxu0 0
    %285 = vmatmul.mubr.bf16.gmra.mrb[0].mxu0 %v128
    %v286 = vpop.f32.mrb[0].mxu0
    %v287 = vadd.f32 %v178, %v286
    %v288 = vpop.f32.mrb[0].mxu0
    %v289 = vpop.f32.mrb[0].mxu0
    %v290 = vadd.f32 %v178, %v289
    %v291 = vpop.f32.mrb[0].mxu0
    %292 = vmatprep.mubr.bf16.mxu0 0
    %293 = vmatmul.mubr.bf16.gmra.mrb[0].mxu0 %v129
    %v294 = vpop.f32.mrb[0].mxu0
    %v295 = vadd.f32 %v178, %v294
    %v296 = vpop.f32.mrb[0].mxu0
    %v297 = vpop.f32.mrb[0].mxu0
    %v298 = vadd.f32 %v178, %v297
    %v299 = vpop.f32.mrb[0].mxu0
    %300 = vmatprep.mubr.bf16.mxu0 0
    %301 = vmatmul.mubr.bf16.gmra.mrb[0].mxu0 %v130
    %v302 = vpop.f32.mrb[0].mxu0
    %v303 = vadd.f32 %v178, %v302
    %v304 = vpop.f32.mrb[0].mxu0
    %v305 = vpop.f32.mrb[0].mxu0
    %v306 = vadd.f32 %v178, %v305
    %v307 = vpop.f32.mrb[0].mxu0
    %308 = vmatprep.mubr.bf16.mxu0 0
    %309 = vmatmul.mubr.bf16.gmra.mrb[0].mxu0 %v131
    %v310 = vpop.f32.mrb[0].mxu0
    %v311 = vadd.f32 %v178, %v310
    %v312 = vpop.f32.mrb[0].mxu0
    %v313 = vpop.f32.mrb[0].mxu0
    %v314 = vadd.f32 %v178, %v313
    %v315 = vpop.f32.mrb[0].mxu0
    %316 = vmatprep.mubr.bf16.mxu0 0
    %317 = vmatmul.mubr.bf16.gmra.mrb[0].mxu0 %v132
    %v318 = vpop.f32.mrb[0].mxu0
    %v319 = vadd.f32 %v178, %v318
    %v320 = vpop.f32.mrb[0].mxu0
    %v321 = vpop.f32.mrb[0].mxu0
    %v322 = vadd.f32 %v178, %v321
    %v323 = vpop.f32.mrb[0].mxu0
    %324 = vmatprep.mubr.bf16.mxu0 0
    %325 = vmatmul.mubr.bf16.gmra.mrb[0].mxu0 %v133
    %v326 = vpop.f32.mrb[0].mxu0
    %v327 = vadd.f32 %v178, %v326
    %v328 = vpop.f32.mrb[0].mxu0
    %v329 = vpop.f32.mrb[0].mxu0
    %v330 = vadd.f32 %v178, %v329
    %v331 = vpop.f32.mrb[0].mxu0
    %332 = vmatprep.mubr.bf16.mxu0 0
    %333 = vmatmul.mubr.bf16.gmra.mrb[0].mxu0 %v134
    %v334 = vpop.f32.mrb[0].mxu0
    %v335 = vadd.f32 %v178, %v334
    %v336 = vpop.f32.mrb[0].mxu0
    %v337 = vpop.f32.mrb[0].mxu0
    %v338 = vadd.f32 %v178, %v337
    %v339 = vpop.f32.mrb[0].mxu0
    %340 = vmatprep.mubr.bf16.mxu0 0
    %341 = vmatmul.mubr.bf16.gmra.mrb[0].mxu0 %v135
    %v342 = vpop.f32.mrb[0].mxu0
    %v343 = vadd.f32 %v178, %v342
    %v344 = vpop.f32.mrb[0].mxu0
    %v345 = vpop.f32.mrb[0].mxu0
    %v346 = vadd.f32 %v178, %v345
    %v347 = vpop.f32.mrb[0].mxu0
    %348 = vmatprep.mubr.bf16.mxu0 0
    %349 = vmatmul.mubr.bf16.gmra.mrb[0].mxu0 %v136
    %v350 = vpop.f32.mrb[0].mxu0
    %v351 = vadd.f32 %v178, %v350
    %v352 = vpop.f32.mrb[0].mxu0
    %v353 = vpop.f32.mrb[0].mxu0
    %v354 = vadd.f32 %v178, %v353
    %v355 = vpop.f32.mrb[0].mxu0
    %356 = vmatprep.mubr.bf16.mxu0 0
    %357 = vmatmul.mubr.bf16.gmra.mrb[0].mxu0 %v137
    %v358 = vpop.f32.mrb[0].mxu0
    %v359 = vadd.f32 %v178, %v358
    %v360 = vpop.f32.mrb[0].mxu0
    %v361 = vpop.f32.mrb[0].mxu0
    %v362 = vadd.f32 %v178, %v361
    %v363 = vpop.f32.mrb[0].mxu0
    %364 = vmatprep.mubr.bf16.mxu0 0
    %365 = vmatmul.mubr.bf16.gmra.mrb[0].mxu0 %v138
    %v366 = vpop.f32.mrb[0].mxu0
    %v367 = vadd.f32 %v178, %v366
    %v368 = vpop.f32.mrb[0].mxu0
    %v369 = vpop.f32.mrb[0].mxu0
    %v370 = vadd.f32 %v178, %v369
    %v371 = vpop.f32.mrb[0].mxu0
    %372 = vmatprep.mubr.bf16.mxu0 0
    %373 = vmatmul.mubr.bf16.gmra.mrb[0].mxu0 %v139
    %v374 = vpop.f32.mrb[0].mxu0
    %v375 = vadd.f32 %v178, %v374
    %v376 = vpop.f32.mrb[0].mxu0
    %v377 = vpop.f32.mrb[0].mxu0
    %v378 = vadd.f32 %v178, %v377
    %v379 = vpop.f32.mrb[0].mxu0
    %380 = vmatprep.mubr.bf16.mxu0 0
    %381 = vmatmul.mubr.bf16.gmra.mrb[0].mxu0 %v140
    %v382 = vpop.f32.mrb[0].mxu0
    %v383 = vadd.f32 %v178, %v382
    %v384 = vpop.f32.mrb[0].mxu0
    %v385 = vpop.f32.mrb[0].mxu0
    %v386 = vadd.f32 %v178, %v385
    %v387 = vpop.f32.mrb[0].mxu0
    %388 = vmatprep.mubr.bf16.mxu0 0
    %389 = vmatmul.mubr.bf16.gmra.mrb[0].mxu0 %v141
    %v390 = vpop.f32.mrb[0].mxu0
    %v391 = vadd.f32 %v178, %v390
    %v392 = vpop.f32.mrb[0].mxu0
    %v393 = vpop.f32.mrb[0].mxu0
    %v394 = vadd.f32 %v178, %v393
    %v395 = vpop.f32.mrb[0].mxu0
    %396 = vmatprep.mubr.bf16.mxu0 0
    %397 = vmatmul.mubr.bf16.gmra.mrb[0].mxu0 %v142
    %v398 = vpop.f32.mrb[0].mxu0
    %v399 = vadd.f32 %v178, %v398
    %v400 = vpop.f32.mrb[0].mxu0
    %v401 = vpop.f32.mrb[0].mxu0
    %v402 = vadd.f32 %v178, %v401
    %v403 = vpop.f32.mrb[0].mxu0
    %404 = vmatprep.mubr.bf16.mxu0 0
    %405 = vmatmul.mubr.bf16.gmra.mrb[0].mxu0 %v143
    %v406 = vpop.f32.mrb[0].mxu0
    %v407 = vadd.f32 %v178, %v406
    %v408 = vpop.f32.mrb[0].mxu0
    %v409 = vpop.f32.mrb[0].mxu0
    %v410 = vadd.f32 %v178, %v409
    %v411 = vpop.f32.mrb[0].mxu0
    %412 = vmatprep.mubr.bf16.mxu0 0
    %413 = vmatmul.mubr.bf16.gmra.mrb[0].mxu0 %v144
    %v414 = vpop.f32.mrb[0].mxu0
    %v415 = vadd.f32 %v178, %v414
    %v416 = vpop.f32.mrb[0].mxu0
    %v417 = vpop.f32.mrb[0].mxu0
    %v418 = vadd.f32 %v178, %v417
    %v419 = vpop.f32.mrb[0].mxu0
    %420 = vmatprep.mubr.bf16.mxu0 0
    %421 = vmatmul.mubr.bf16.gmra.mrb[0].mxu0 %v145
    %v422 = vpop.f32.mrb[0].mxu0
    %v423 = vadd.f32 %v178, %v422
    %v424 = vpop.f32.mrb[0].mxu0
    %v425 = vpop.f32.mrb[0].mxu0
    %v426 = vadd.f32 %v178, %v425
    %v427 = vpop.f32.mrb[0].mxu0
    %428 = vmatprep.mubr.bf16.mxu0 0
    %429 = vmatmul.mubr.bf16.gmra.mrb[0].mxu0 %v146
    %v430 = vpop.f32.mrb[0].mxu0
    %v431 = vadd.f32 %v178, %v430
    %v432 = vpop.f32.mrb[0].mxu0
    %v433 = vpop.f32.mrb[0].mxu0
    %v434 = vadd.f32 %v178, %v433
    %v435 = vpop.f32.mrb[0].mxu0
    %436 = vmatprep.mubr.bf16.mxu0 0
    %437 = vmatmul.mubr.bf16.gmra.mrb[0].mxu0 %v147
    %v438 = vpop.f32.mrb[0].mxu0
    %v439 = vadd.f32 %v178, %v438
    %v440 = vpop.f32.mrb[0].mxu0
    %v441 = vpop.f32.mrb[0].mxu0
    %v442 = vadd.f32 %v178, %v441
    %v443 = vpop.f32.mrb[0].mxu0
    %444 = vmatprep.mubr.bf16.mxu0 0
    %445 = vmatmul.mubr.bf16.gmra.mrb[0].mxu0 %v148
    %v446 = vpop.f32.mrb[0].mxu0
    %v447 = vadd.f32 %v178, %v446
    %v448 = vpop.f32.mrb[0].mxu0
    %v449 = vpop.f32.mrb[0].mxu0
    %v450 = vadd.f32 %v178, %v449
    %v451 = vpop.f32.mrb[0].mxu0
    %452 = vmatprep.mubr.bf16.mxu0 0
    %453 = vmatmul.mubr.bf16.gmra.mrb[0].mxu0 %v149
    %v454 = vpop.f32.mrb[0].mxu0
    %v455 = vadd.f32 %v178, %v454
    %v456 = vpop.f32.mrb[0].mxu0
    %v457 = vpop.f32.mrb[0].mxu0
    %v458 = vadd.f32 %v178, %v457
    %v459 = vpop.f32.mrb[0].mxu0
    %460 = vmatprep.mubr.bf16.mxu0 0
    %461 = vmatmul.mubr.bf16.gmra.mrb[0].mxu0 %v150
    %v462 = vpop.f32.mrb[0].mxu0
    %v463 = vadd.f32 %v178, %v462
    %v464 = vpop.f32.mrb[0].mxu0
    %v465 = vpop.f32.mrb[0].mxu0
    %v466 = vadd.f32 %v178, %v465
    %v467 = vpop.f32.mrb[0].mxu0
    %468 = vmatprep.mubr.bf16.mxu0 0
    %469 = vmatmul.mubr.bf16.gmra.mrb[0].mxu0 %v151
    %v470 = vpop.f32.mrb[0].mxu0
    %v471 = vadd.f32 %v178, %v470
    %v472 = vpop.f32.mrb[0].mxu0
    %v473 = vpop.f32.mrb[0].mxu0
    %v474 = vadd.f32 %v178, %v473
    %v475 = vpop.f32.mrb[0].mxu0
    %476 = vmatprep.mubr.bf16.mxu0 0
    %477 = vmatmul.mubr.bf16.gmra.mrb[0].mxu0 %v152
    %v478 = vpop.f32.mrb[0].mxu0
    %v479 = vadd.f32 %v178, %v478
    %v480 = vpop.f32.mrb[0].mxu0
    %v481 = vpop.f32.mrb[0].mxu0
    %v482 = vadd.f32 %v178, %v481
    %v483 = vpop.f32.mrb[0].mxu0
    %484 = vmatprep.mubr.bf16.mxu0 0
    %485 = vmatmul.mubr.bf16.gmra.mrb[0].mxu0 %v153
    %v486 = vpop.f32.mrb[0].mxu0
    %v487 = vadd.f32 %v178, %v486
    %v488 = vpop.f32.mrb[0].mxu0
    %v489 = vpop.f32.mrb[0].mxu0
    %v490 = vadd.f32 %v178, %v489
    %v491 = vpop.f32.mrb[0].mxu0
    %492 = vmatprep.mubr.bf16.mxu0 0
    %493 = vmatmul.mubr.bf16.gmra.mrb[0].mxu0 %v154
    %v494 = vpop.f32.mrb[0].mxu0
    %v495 = vadd.f32 %v178, %v494
    %v496 = vpop.f32.mrb[0].mxu0
    %v497 = vpop.f32.mrb[0].mxu0
    %v498 = vadd.f32 %v178, %v497
    %v499 = vpop.f32.mrb[0].mxu0
    %500 = vmatprep.mubr.bf16.mxu0 0
    %501 = vmatmul.mubr.bf16.gmra.mrb[0].mxu0 %v155
    %v502 = vpop.f32.mrb[0].mxu0
    %v503 = vadd.f32 %v178, %v502
    %v504 = vpop.f32.mrb[0].mxu0
    %v505 = vpop.f32.mrb[0].mxu0
    %v506 = vadd.f32 %v178, %v505
    %v507 = vpop.f32.mrb[0].mxu0
    %508 = vmatprep.mubr.bf16.mxu0 0
    %509 = vmatmul.mubr.bf16.gmra.mrb[0].mxu0 %v156
    %v510 = vpop.f32.mrb[0].mxu0
    %v511 = vadd.f32 %v178, %v510
    %v512 = vpop.f32.mrb[0].mxu0
    %v513 = vpop.f32.mrb[0].mxu0
    %v514 = vadd.f32 %v178, %v513
    %v515 = vpop.f32.mrb[0].mxu0
    %516 = vdwg.mxu0
    %v517 = vmax.f32 %v263, 0.0
    %v518 = vmax.f32 %v266, 0.0
    %v519 = vmax.f32 %v271, 0.0
    %v520 = vmax.f32 %v274, 0.0
    %v521 = vmax.f32 %v279, 0.0
    %v522 = vmax.f32 %v282, 0.0
    %v523 = vmax.f32 %v287, 0.0
    %v524 = vmax.f32 %v290, 0.0
    %v525 = vmax.f32 %v295, 0.0
    %v526 = vmax.f32 %v298, 0.0
    %v527 = vmax.f32 %v303, 0.0
    %v528 = vmax.f32 %v306, 0.0
    %v529 = vmax.f32 %v311, 0.0
    %v530 = vmax.f32 %v314, 0.0
    %v531 = vmax.f32 %v319, 0.0
    %v532 = vmax.f32 %v322, 0.0
    %v533 = vmax.f32 %v327, 0.0
    %v534 = vmax.f32 %v330, 0.0
    %v535 = vmax.f32 %v335, 0.0
    %v536 = vmax.f32 %v338, 0.0
    %v537 = vmax.f32 %v343, 0.0
    %v538 = vmax.f32 %v346, 0.0
    %v539 = vmax.f32 %v351, 0.0
    %v540 = vmax.f32 %v354, 0.0
    %v541 = vmax.f32 %v359, 0.0
    %v542 = vmax.f32 %v362, 0.0
    %v543 = vmax.f32 %v367, 0.0
    %v544 = vmax.f32 %v370, 0.0
    %v545 = vmax.f32 %v375, 0.0
    %v546 = vmax.f32 %v378, 0.0
    %v547 = vmax.f32 %v383, 0.0
    %v548 = vmax.f32 %v386, 0.0
    %v549 = vmax.f32 %v391, 0.0
    %v550 = vmax.f32 %v394, 0.0
    %v551 = vmax.f32 %v399, 0.0
    %v552 = vmax.f32 %v402, 0.0
    %v553 = vmax.f32 %v407, 0.0
    %v554 = vmax.f32 %v410, 0.0
    %v555 = vmax.f32 %v415, 0.0
    %v556 = vmax.f32 %v418, 0.0
    %v557 = vmax.f32 %v423, 0.0
    %v558 = vmax.f32 %v426, 0.0
    %v559 = vmax.f32 %v431, 0.0
    %v560 = vmax.f32 %v434, 0.0
    %v561 = vmax.f32 %v439, 0.0
    %v562 = vmax.f32 %v442, 0.0
    %v563 = vmax.f32 %v447, 0.0
    %v564 = vmax.f32 %v450, 0.0
    %v565 = vmax.f32 %v455, 0.0
    %v566 = vmax.f32 %v458, 0.0
    %v567 = vmax.f32 %v463, 0.0
    %v568 = vmax.f32 %v466, 0.0
    %v569 = vmax.f32 %v471, 0.0
    %v570 = vmax.f32 %v474, 0.0
    %v571 = vmax.f32 %v479, 0.0
    %v572 = vmax.f32 %v482, 0.0
    %v573 = vmax.f32 %v487, 0.0
    %v574 = vmax.f32 %v490, 0.0
    %v575 = vmax.f32 %v495, 0.0
    %v576 = vmax.f32 %v498, 0.0
    %v577 = vmax.f32 %v503, 0.0
    %v578 = vmax.f32 %v506, 0.0
    %v579 = vmax.f32 %v511, 0.0
    %v580 = vmax.f32 %v514, 0.0
    %v581 = vld [vmem:[%s2] sm:$0xff]
    %v582 = vld [vmem:[%s2 + $0x8] sm:$0xff]
    %v583 = vld [vmem:[%s2 + $0x10] sm:$0xff]
    %v584 = vld [vmem:[%s2 + $0x18] sm:$0xff]
    %v585 = vld [vmem:[%s2 + $0x20] sm:$0xff]
    %v586 = vld [vmem:[%s2 + $0x28] sm:$0xff]
    %v587 = vld [vmem:[%s2 + $0x30] sm:$0xff]
    %v588 = vld [vmem:[%s2 + $0x38] sm:$0xff]
    %v589 = vld [vmem:[%s2 + $0x40] sm:$0xff]
    %v590 = vld [vmem:[%s2 + $0x48] sm:$0xff]
    %v591 = vld [vmem:[%s2 + $0x50] sm:$0xff]
    %v592 = vld [vmem:[%s2 + $0x58] sm:$0xff]
    %v593 = vld [vmem:[%s2 + $0x60] sm:$0xff]
    %v594 = vld [vmem:[%s2 + $0x68] sm:$0xff]
    %v595 = vld [vmem:[%s2 + $0x70] sm:$0xff]
    %v596 = vld [vmem:[%s2 + $0x78] sm:$0xff]
    %v597 = vld [vmem:[%s2 + $0x80] sm:$0xff]
    %v598 = vld [vmem:[%s2 + $0x88] sm:$0xff]
    %v599 = vld [vmem:[%s2 + $0x90] sm:$0xff]
    %v600 = vld [vmem:[%s2 + $0x98] sm:$0xff]
    %v601 = vld [vmem:[%s2 + $0xa0] sm:$0xff]
    %v602 = vld [vmem:[%s2 + $0xa8] sm:$0xff]
    %v603 = vld [vmem:[%s2 + $0xb0] sm:$0xff]
    %v604 = vld [vmem:[%s2 + $0xb8] sm:$0xff]
    %v605 = vld [vmem:[%s2 + $0xc0] sm:$0xff]
    %v606 = vld [vmem:[%s2 + $0xc8] sm:$0xff]
    %v607 = vld [vmem:[%s2 + $0xd0] sm:$0xff]
    %v608 = vld [vmem:[%s2 + $0xd8] sm:$0xff]
    %v609 = vld [vmem:[%s2 + $0xe0] sm:$0xff]
    %v610 = vld [vmem:[%s2 + $0xe8] sm:$0xff]
    %v611 = vld [vmem:[%s2 + $0xf0] sm:$0xff]
    %v612 = vld [vmem:[%s2 + $0xf8] sm:$0xff]
    %v613 = vld [vmem:[%s2 + $0x100] sm:$0xff]
    %v614 = vld [vmem:[%s2 + $0x108] sm:$0xff]
    %v615 = vld [vmem:[%s2 + $0x110] sm:$0xff]
    %v616 = vld [vmem:[%s2 + $0x118] sm:$0xff]
    %v617 = vld [vmem:[%s2 + $0x120] sm:$0xff]
    %v618 = vld [vmem:[%s2 + $0x128] sm:$0xff]
    %v619 = vld [vmem:[%s2 + $0x130] sm:$0xff]
    %v620 = vld [vmem:[%s2 + $0x138] sm:$0xff]
    %v621 = vld [vmem:[%s2 + $0x140] sm:$0xff]
    %v622 = vld [vmem:[%s2 + $0x148] sm:$0xff]
    %v623 = vld [vmem:[%s2 + $0x150] sm:$0xff]
    %v624 = vld [vmem:[%s2 + $0x158] sm:$0xff]
    %v625 = vld [vmem:[%s2 + $0x160] sm:$0xff]
    %v626 = vld [vmem:[%s2 + $0x168] sm:$0xff]
    %v627 = vld [vmem:[%s2 + $0x170] sm:$0xff]
    %v628 = vld [vmem:[%s2 + $0x178] sm:$0xff]
    %v629 = vld [vmem:[%s2 + $0x180] sm:$0xff]
    %v630 = vld [vmem:[%s2 + $0x188] sm:$0xff]
    %v631 = vld [vmem:[%s2 + $0x190] sm:$0xff]
    %v632 = vld [vmem:[%s2 + $0x198] sm:$0xff]
    %v633 = vld [vmem:[%s2 + $0x1a0] sm:$0xff]
    %v634 = vld [vmem:[%s2 + $0x1a8] sm:$0xff]
    %v635 = vld [vmem:[%s2 + $0x1b0] sm:$0xff]
    %v636 = vld [vmem:[%s2 + $0x1b8] sm:$0xff]
    %v637 = vld [vmem:[%s2 + $0x1c0] sm:$0xff]
    %v638 = vld [vmem:[%s2 + $0x1c8] sm:$0xff]
    %v639 = vld [vmem:[%s2 + $0x1d0] sm:$0xff]
    %v640 = vld [vmem:[%s2 + $0x1d8] sm:$0xff]
    %v641 = vld [vmem:[%s2 + $0x1e0] sm:$0xff]
    %v642 = vld [vmem:[%s2 + $0x1e8] sm:$0xff]
    %v643 = vld [vmem:[%s2 + $0x1f0] sm:$0xff]
    %v644 = vld [vmem:[%s2 + $0x1f8] sm:$0xff]
    %646 = vset.pattern.permute.xlu0 0
    %647 = vperm.xlu0 %646, %v581
    %v648 = vpop.permute.xlu0 %647
    %651 = vset.pattern.permute.xlu0 0
    %652 = vperm.xlu0 %651, %v582
    %v653 = vpop.permute.xlu0 %652
    %656 = vset.pattern.permute.xlu0 0
    %657 = vperm.xlu0 %656, %v583
    %v658 = vpop.permute.xlu0 %657
    %661 = vset.pattern.permute.xlu0 0
    %662 = vperm.xlu0 %661, %v584
    %v663 = vpop.permute.xlu0 %662
    %666 = vset.pattern.permute.xlu0 0
    %667 = vperm.xlu0 %666, %v585
    %v668 = vpop.permute.xlu0 %667
    %671 = vset.pattern.permute.xlu0 0
    %672 = vperm.xlu0 %671, %v586
    %v673 = vpop.permute.xlu0 %672
    %676 = vset.pattern.permute.xlu0 0
    %677 = vperm.xlu0 %676, %v587
    %v678 = vpop.permute.xlu0 %677
    %681 = vset.pattern.permute.xlu0 0
    %682 = vperm.xlu0 %681, %v588
    %v683 = vpop.permute.xlu0 %682
    %686 = vset.pattern.permute.xlu0 0
    %687 = vperm.xlu0 %686, %v589
    %v688 = vpop.permute.xlu0 %687
    %691 = vset.pattern.permute.xlu0 0
    %692 = vperm.xlu0 %691, %v590
    %v693 = vpop.permute.xlu0 %692
    %696 = vset.pattern.permute.xlu0 0
    %697 = vperm.xlu0 %696, %v591
    %v698 = vpop.permute.xlu0 %697
    %701 = vset.pattern.permute.xlu0 0
    %702 = vperm.xlu0 %701, %v592
    %v703 = vpop.permute.xlu0 %702
    %706 = vset.pattern.permute.xlu0 0
    %707 = vperm.xlu0 %706, %v593
    %v708 = vpop.permute.xlu0 %707
    %711 = vset.pattern.permute.xlu0 0
    %712 = vperm.xlu0 %711, %v594
    %v713 = vpop.permute.xlu0 %712
    %716 = vset.pattern.permute.xlu0 0
    %717 = vperm.xlu0 %716, %v595
    %v718 = vpop.permute.xlu0 %717
    %721 = vset.pattern.permute.xlu0 0
    %722 = vperm.xlu0 %721, %v596
    %v723 = vpop.permute.xlu0 %722
    %726 = vset.pattern.permute.xlu0 0
    %727 = vperm.xlu0 %726, %v597
    %v728 = vpop.permute.xlu0 %727
    %731 = vset.pattern.permute.xlu0 0
    %732 = vperm.xlu0 %731, %v598
    %v733 = vpop.permute.xlu0 %732
    %736 = vset.pattern.permute.xlu0 0
    %737 = vperm.xlu0 %736, %v599
    %v738 = vpop.permute.xlu0 %737
    %741 = vset.pattern.permute.xlu0 0
    %742 = vperm.xlu0 %741, %v600
    %v743 = vpop.permute.xlu0 %742
    %746 = vset.pattern.permute.xlu0 0
    %747 = vperm.xlu0 %746, %v601
    %v748 = vpop.permute.xlu0 %747
    %751 = vset.pattern.permute.xlu0 0
    %752 = vperm.xlu0 %751, %v602
    %v753 = vpop.permute.xlu0 %752
    %756 = vset.pattern.permute.xlu0 0
    %757 = vperm.xlu0 %756, %v603
    %v758 = vpop.permute.xlu0 %757
    %761 = vset.pattern.permute.xlu0 0
    %762 = vperm.xlu0 %761, %v604
    %v763 = vpop.permute.xlu0 %762
    %766 = vset.pattern.permute.xlu0 0
    %767 = vperm.xlu0 %766, %v605
    %v768 = vpop.permute.xlu0 %767
    %771 = vset.pattern.permute.xlu0 0
    %772 = vperm.xlu0 %771, %v606
    %v773 = vpop.permute.xlu0 %772
    %776 = vset.pattern.permute.xlu0 0
    %777 = vperm.xlu0 %776, %v607
    %v778 = vpop.permute.xlu0 %777
    %781 = vset.pattern.permute.xlu0 0
    %782 = vperm.xlu0 %781, %v608
    %v783 = vpop.permute.xlu0 %782
    %786 = vset.pattern.permute.xlu0 0
    %787 = vperm.xlu0 %786, %v609
    %v788 = vpop.permute.xlu0 %787
    %791 = vset.pattern.permute.xlu0 0
    %792 = vperm.xlu0 %791, %v610
    %v793 = vpop.permute.xlu0 %792
    %796 = vset.pattern.permute.xlu0 0
    %797 = vperm.xlu0 %796, %v611
    %v798 = vpop.permute.xlu0 %797
    %801 = vset.pattern.permute.xlu0 0
    %802 = vperm.xlu0 %801, %v612
    %v803 = vpop.permute.xlu0 %802
    %806 = vset.pattern.permute.xlu0 0
    %807 = vperm.xlu0 %806, %v613
    %v808 = vpop.permute.xlu0 %807
    %811 = vset.pattern.permute.xlu0 0
    %812 = vperm.xlu0 %811, %v614
    %v813 = vpop.permute.xlu0 %812
    %816 = vset.pattern.permute.xlu0 0
    %817 = vperm.xlu0 %816, %v615
    %v818 = vpop.permute.xlu0 %817
    %821 = vset.pattern.permute.xlu0 0
    %822 = vperm.xlu0 %821, %v616
    %v823 = vpop.permute.xlu0 %822
    %826 = vset.pattern.permute.xlu0 0
    %827 = vperm.xlu0 %826, %v617
    %v828 = vpop.permute.xlu0 %827
    %831 = vset.pattern.permute.xlu0 0
    %832 = vperm.xlu0 %831, %v618
    %v833 = vpop.permute.xlu0 %832
    %836 = vset.pattern.permute.xlu0 0
    %837 = vperm.xlu0 %836, %v619
    %v838 = vpop.permute.xlu0 %837
    %841 = vset.pattern.permute.xlu0 0
    %842 = vperm.xlu0 %841, %v620
    %v843 = vpop.permute.xlu0 %842
    %846 = vset.pattern.permute.xlu0 0
    %847 = vperm.xlu0 %846, %v621
    %v848 = vpop.permute.xlu0 %847
    %851 = vset.pattern.permute.xlu0 0
    %852 = vperm.xlu0 %851, %v622
    %v853 = vpop.permute.xlu0 %852
    %856 = vset.pattern.permute.xlu0 0
    %857 = vperm.xlu0 %856, %v623
    %v858 = vpop.permute.xlu0 %857
    %861 = vset.pattern.permute.xlu0 0
    %862 = vperm.xlu0 %861, %v624
    %v863 = vpop.permute.xlu0 %862
    %866 = vset.pattern.permute.xlu0 0
    %867 = vperm.xlu0 %866, %v625
    %v868 = vpop.permute.xlu0 %867
    %871 = vset.pattern.permute.xlu0 0
    %872 = vperm.xlu0 %871, %v626
    %v873 = vpop.permute.xlu0 %872
    %876 = vset.pattern.permute.xlu0 0
    %877 = vperm.xlu0 %876, %v627
    %v878 = vpop.permute.xlu0 %877
    %881 = vset.pattern.permute.xlu0 0
    %882 = vperm.xlu0 %881, %v628
    %v883 = vpop.permute.xlu0 %882
    %886 = vset.pattern.permute.xlu0 0
    %887 = vperm.xlu0 %886, %v629
    %v888 = vpop.permute.xlu0 %887
    %891 = vset.pattern.permute.xlu0 0
    %892 = vperm.xlu0 %891, %v630
    %v893 = vpop.permute.xlu0 %892
    %896 = vset.pattern.permute.xlu0 0
    %897 = vperm.xlu0 %896, %v631
    %v898 = vpop.permute.xlu0 %897
    %901 = vset.pattern.permute.xlu0 0
    %902 = vperm.xlu0 %901, %v632
    %v903 = vpop.permute.xlu0 %902
    %906 = vset.pattern.permute.xlu0 0
    %907 = vperm.xlu0 %906, %v633
    %v908 = vpop.permute.xlu0 %907
    %911 = vset.pattern.permute.xlu0 0
    %912 = vperm.xlu0 %911, %v634
    %v913 = vpop.permute.xlu0 %912
    %916 = vset.pattern.permute.xlu0 0
    %917 = vperm.xlu0 %916, %v635
    %v918 = vpop.permute.xlu0 %917
    %921 = vset.pattern.permute.xlu0 0
    %922 = vperm.xlu0 %921, %v636
    %v923 = vpop.permute.xlu0 %922
    %926 = vset.pattern.permute.xlu0 0
    %927 = vperm.xlu0 %926, %v637
    %v928 = vpop.permute.xlu0 %927
    %931 = vset.pattern.permute.xlu0 0
    %932 = vperm.xlu0 %931, %v638
    %v933 = vpop.permute.xlu0 %932
    %936 = vset.pattern.permute.xlu0 0
    %937 = vperm.xlu0 %936, %v639
    %v938 = vpop.permute.xlu0 %937
    %941 = vset.pattern.permute.xlu0 0
    %942 = vperm.xlu0 %941, %v640
    %v943 = vpop.permute.xlu0 %942
    %946 = vset.pattern.permute.xlu0 0
    %947 = vperm.xlu0 %946, %v641
    %v948 = vpop.permute.xlu0 %947
    %951 = vset.pattern.permute.xlu0 0
    %952 = vperm.xlu0 %951, %v642
    %v953 = vpop.permute.xlu0 %952
    %956 = vset.pattern.permute.xlu0 0
    %957 = vperm.xlu0 %956, %v643
    %v958 = vpop.permute.xlu0 %957
    %961 = vset.pattern.permute.xlu0 0
    %962 = vperm.xlu0 %961, %v644
    %v963 = vpop.permute.xlu0 %962
    %v965 = vmul.f32 %v517, %v648
    %v966 = vmul.f32 %v518, %v653
    %v967 = vmul.f32 %v519, %v658
    %v968 = vmul.f32 %v520, %v663
    %v969 = vmul.f32 %v521, %v668
    %v970 = vmul.f32 %v522, %v673
    %v971 = vmul.f32 %v523, %v678
    %v972 = vmul.f32 %v524, %v683
    %v973 = vmul.f32 %v525, %v688
    %v974 = vmul.f32 %v526, %v693
    %v975 = vmul.f32 %v527, %v698
    %v976 = vmul.f32 %v528, %v703
    %v977 = vmul.f32 %v529, %v708
    %v978 = vmul.f32 %v530, %v713
    %v979 = vmul.f32 %v531, %v718
    %v980 = vmul.f32 %v532, %v723
    %v981 = vmul.f32 %v533, %v728
    %v982 = vmul.f32 %v534, %v733
    %v983 = vmul.f32 %v535, %v738
    %v984 = vmul.f32 %v536, %v743
    %v985 = vmul.f32 %v537, %v748
    %v986 = vmul.f32 %v538, %v753
    %v987 = vmul.f32 %v539, %v758
    %v988 = vmul.f32 %v540, %v763
    %v989 = vmul.f32 %v541, %v768
    %v990 = vmul.f32 %v542, %v773
    %v991 = vmul.f32 %v543, %v778
    %v992 = vmul.f32 %v544, %v783
    %v993 = vmul.f32 %v545, %v788
    %v994 = vmul.f32 %v546, %v793
    %v995 = vmul.f32 %v547, %v798
    %v996 = vmul.f32 %v548, %v803
    %v997 = vmul.f32 %v549, %v808
    %v998 = vmul.f32 %v550, %v813
    %v999 = vmul.f32 %v551, %v818
    %v1000 = vmul.f32 %v552, %v823
    %v1001 = vmul.f32 %v553, %v828
    %v1002 = vmul.f32 %v554, %v833
    %v1003 = vmul.f32 %v555, %v838
    %v1004 = vmul.f32 %v556, %v843
    %v1005 = vmul.f32 %v557, %v848
    %v1006 = vmul.f32 %v558, %v853
    %v1007 = vmul.f32 %v559, %v858
    %v1008 = vmul.f32 %v560, %v863
    %v1009 = vmul.f32 %v561, %v868
    %v1010 = vmul.f32 %v562, %v873
    %v1011 = vmul.f32 %v563, %v878
    %v1012 = vmul.f32 %v564, %v883
    %v1013 = vmul.f32 %v565, %v888
    %v1014 = vmul.f32 %v566, %v893
    %v1015 = vmul.f32 %v567, %v898
    %v1016 = vmul.f32 %v568, %v903
    %v1017 = vmul.f32 %v569, %v908
    %v1018 = vmul.f32 %v570, %v913
    %v1019 = vmul.f32 %v571, %v918
    %v1020 = vmul.f32 %v572, %v923
    %v1021 = vmul.f32 %v573, %v928
    %v1022 = vmul.f32 %v574, %v933
    %v1023 = vmul.f32 %v575, %v938
    %v1024 = vmul.f32 %v576, %v943
    %v1025 = vmul.f32 %v577, %v948
    %v1026 = vmul.f32 %v578, %v953
    %v1027 = vmul.f32 %v579, %v958
    %v1028 = vmul.f32 %v580, %v963
    %v1029 = vlaneseq
    %v1030 = vshrl.u32 %v1029, 7
    %v1031 = vld [vmem:[%s1] sm:$0xf]
    %v1032 = vlaneseq
    %v1033 = vshrl.u32 %v1032, 7
    %v1034 = vsub.s32 0, %v1033
    %v1035 = vrot.slane %v1031, %v1034
    %v1036 = vlaneseq
    %v1037 = vshrl.u32 %v1036, 7
    %v1038 = vsub.s32 1, %v1037
    %v1039 = vrot.slane %v1031, %v1038
    %v1040 = vlaneseq
    %v1041 = vshrl.u32 %v1040, 7
    %v1042 = vsub.s32 2, %v1041
    %v1043 = vrot.slane %v1031, %v1042
    %v1044 = vlaneseq
    %v1045 = vshrl.u32 %v1044, 7
    %v1046 = vsub.s32 3, %v1045
    %v1047 = vrot.slane %v1031, %v1046
    %vm1048 = vcmp.eq.s32.totalorder %v1030, %v1035
    %vm1049 = vcmp.eq.s32.totalorder %v1030, %v1039
    %vm1050 = vcmp.eq.s32.totalorder %v1030, %v1043
    %vm1051 = vcmp.eq.s32.totalorder %v1030, %v1047
    %v1052 = vsel %vm1048, 1, 0
    %v1053 = vsel %vm1049, 1, 0
    %v1054 = vsel %vm1050, 1, 0
    %v1055 = vsel %vm1051, 1, 0
    %v1056 = vcvt.s32.f32 %v1052
    %v1057 = vcvt.s32.f32 %v1053
    %v1058 = vcvt.s32.f32 %v1054
    %v1059 = vcvt.s32.f32 %v1055
    %v1060 = vpack.c.bf16 %v1056, %v1056
    %v1061 = vpack.c.bf16 %v1057, %v1057
    %v1062 = vpack.c.bf16 %v1058, %v1058
    %v1063 = vpack.c.bf16 %v1059, %v1059
    %v1064 = vld [vmem:[#allocation2] sm:$0xff]
    %v1065 = vpack.c.bf16 %v966, %v965
    %v1066 = vpack.c.bf16 %v968, %v967
    %v1067 = vpack.c.bf16 %v970, %v969
    %v1068 = vpack.c.bf16 %v972, %v971
    %v1069 = vpack.c.bf16 %v974, %v973
    %v1070 = vpack.c.bf16 %v976, %v975
    %v1071 = vpack.c.bf16 %v978, %v977
    %v1072 = vpack.c.bf16 %v980, %v979
    %v1073 = vpack.c.bf16 %v982, %v981
    %v1074 = vpack.c.bf16 %v984, %v983
    %v1075 = vpack.c.bf16 %v986, %v985
    %v1076 = vpack.c.bf16 %v988, %v987
    %v1077 = vpack.c.bf16 %v990, %v989
    %v1078 = vpack.c.bf16 %v992, %v991
    %v1079 = vpack.c.bf16 %v994, %v993
    %v1080 = vpack.c.bf16 %v996, %v995
    %v1081 = vpack.c.bf16 %v998, %v997
    %v1082 = vpack.c.bf16 %v1000, %v999
    %v1083 = vpack.c.bf16 %v1002, %v1001
    %v1084 = vpack.c.bf16 %v1004, %v1003
    %v1085 = vpack.c.bf16 %v1006, %v1005
    %v1086 = vpack.c.bf16 %v1008, %v1007
    %v1087 = vpack.c.bf16 %v1010, %v1009
    %v1088 = vpack.c.bf16 %v1012, %v1011
    %v1089 = vpack.c.bf16 %v1014, %v1013
    %v1090 = vpack.c.bf16 %v1016, %v1015
    %v1091 = vpack.c.bf16 %v1018, %v1017
    %v1092 = vpack.c.bf16 %v1020, %v1019
    %v1093 = vpack.c.bf16 %v1022, %v1021
    %v1094 = vpack.c.bf16 %v1024, %v1023
    %v1095 = vpack.c.bf16 %v1026, %v1025
    %v1096 = vpack.c.bf16 %v1028, %v1027
    %1097 = vmatprep.subr.bf16.mxu0 0
    %1098 = vmatpush1.bf16.msra.mxu0 %v1065
    %1099 = vmatprep.subr.bf16.mxu0 0
    %1100 = vmatpush1.bf16.msra.mxu0 %v1066
    %1101 = vmatprep.subr.bf16.mxu0 0
    %1102 = vmatpush1.bf16.msra.mxu0 %v1067
    %1103 = vmatprep.subr.bf16.mxu0 0
    %1104 = vmatpush1.bf16.msra.mxu0 %v1068
    %1105 = vmatprep.subr.bf16.mxu0 0
    %1106 = vmatpush1.bf16.msra.mxu0 %v1069
    %1107 = vmatprep.subr.bf16.mxu0 0
    %1108 = vmatpush1.bf16.msra.mxu0 %v1070
    %1109 = vmatprep.subr.bf16.mxu0 0
    %1110 = vmatpush1.bf16.msra.mxu0 %v1071
    %1111 = vmatprep.subr.bf16.mxu0 0
    %1112 = vmatpush1.bf16.msra.mxu0 %v1072
    %1113 = vmatprep.subr.bf16.mxu0 0
    %1114 = vmatpush1.bf16.msra.mxu0 %v1073
    %1115 = vmatprep.subr.bf16.mxu0 0
    %1116 = vmatpush1.bf16.msra.mxu0 %v1074
    %1117 = vmatprep.subr.bf16.mxu0 0
    %1118 = vmatpush1.bf16.msra.mxu0 %v1075
    %1119 = vmatprep.subr.bf16.mxu0 0
    %1120 = vmatpush1.bf16.msra.mxu0 %v1076
    %1121 = vmatprep.subr.bf16.mxu0 0
    %1122 = vmatpush1.bf16.msra.mxu0 %v1077
    %1123 = vmatprep.subr.bf16.mxu0 0
    %1124 = vmatpush1.bf16.msra.mxu0 %v1078
    %1125 = vmatprep.subr.bf16.mxu0 0
    %1126 = vmatpush1.bf16.msra.mxu0 %v1079
    %1127 = vmatprep.subr.bf16.mxu0 0
    %1128 = vmatpush1.bf16.msra.mxu0 %v1080
    %1129 = vmatprep.mubr.bf16.mxu0 %v1061
    %1130 = vmatmul.mubr.bf16.gmra.mrb[0].mxu0 %v1060
    %v1131 = vpop.f32.mrb[0].mxu0
    %v1132 = vadd.f32 0.0, %v1131
    %v1133 = vpop.f32.mrb[0].mxu0
    %v1134 = vpop.f32.mrb[0].mxu0
    %v1135 = vpop.f32.mrb[0].mxu0
    %1136 = vdwg.mxu0
    %1137 = vmatprep.subr.bf16.mxu0 0
    %1138 = vmatpush1.bf16.msra.mxu0 %v1081
    %1139 = vmatprep.subr.bf16.mxu0 0
    %1140 = vmatpush1.bf16.msra.mxu0 %v1082
    %1141 = vmatprep.subr.bf16.mxu0 0
    %1142 = vmatpush1.bf16.msra.mxu0 %v1083
    %1143 = vmatprep.subr.bf16.mxu0 0
    %1144 = vmatpush1.bf16.msra.mxu0 %v1084
    %1145 = vmatprep.subr.bf16.mxu0 0
    %1146 = vmatpush1.bf16.msra.mxu0 %v1085
    %1147 = vmatprep.subr.bf16.mxu0 0
    %1148 = vmatpush1.bf16.msra.mxu0 %v1086
    %1149 = vmatprep.subr.bf16.mxu0 0
    %1150 = vmatpush1.bf16.msra.mxu0 %v1087
    %1151 = vmatprep.subr.bf16.mxu0 0
    %1152 = vmatpush1.bf16.msra.mxu0 %v1088
    %1153 = vmatprep.subr.bf16.mxu0 0
    %1154 = vmatpush1.bf16.msra.mxu0 %v1089
    %1155 = vmatprep.subr.bf16.mxu0 0
    %1156 = vmatpush1.bf16.msra.mxu0 %v1090
    %1157 = vmatprep.subr.bf16.mxu0 0
    %1158 = vmatpush1.bf16.msra.mxu0 %v1091
    %1159 = vmatprep.subr.bf16.mxu0 0
    %1160 = vmatpush1.bf16.msra.mxu0 %v1092
    %1161 = vmatprep.subr.bf16.mxu0 0
    %1162 = vmatpush1.bf16.msra.mxu0 %v1093
    %1163 = vmatprep.subr.bf16.mxu0 0
    %1164 = vmatpush1.bf16.msra.mxu0 %v1094
    %1165 = vmatprep.subr.bf16.mxu0 0
    %1166 = vmatpush1.bf16.msra.mxu0 %v1095
    %1167 = vmatprep.subr.bf16.mxu0 0
    %1168 = vmatpush1.bf16.msra.mxu0 %v1096
    %1169 = vmatprep.mubr.bf16.mxu0 %v1063
    %1170 = vmatmul.mubr.bf16.gmra.mrb[0].mxu0 %v1062
    %v1171 = vpop.f32.mrb[0].mxu0
    %v1172 = vadd.f32 %v1132, %v1171
    %v1173 = vpop.f32.mrb[0].mxu0
    %v1174 = vpop.f32.mrb[0].mxu0
    %v1175 = vpop.f32.mrb[0].mxu0
    %1176 = vdwg.mxu0
    %v1177 = vadd.f32 %v1064, %v1172
    %1178 = vst [vmem:[#allocation2] sm:$0xff] %v1177
    // Predicated region
    $region42: #{tpu_custom_call.1} parent=1 // pred_check
      %p1179 = pneg %p56
    $region43: #{tpu_custom_call.1} parent=1 // pred_check_branch
      %1181 = sbr.rel (%p1179) target = $region45
    $region44: #{tpu_custom_call.1} parent=1 // pred_region
      %v1182 = vld [vmem:[#allocation2] sm:$0xff]
      %v1183 = vld [vmem:[#allocation6] sm:$0xff]
      %v1184 = vld [vmem:[#allocation6 + $0x8] sm:$0xff]
      %v1185 = vld [vmem:[#allocation6 + $0x10] sm:$0xff]
      %v1186 = vld [vmem:[#allocation6 + $0x18] sm:$0xff]
      %v1187 = vld [vmem:[#allocation6 + $0x20] sm:$0xff]
      %v1188 = vld [vmem:[#allocation6 + $0x28] sm:$0xff]
      %v1189 = vld [vmem:[#allocation6 + $0x30] sm:$0xff]
      %v1190 = vld [vmem:[#allocation6 + $0x38] sm:$0xff]
      %v1191 = vld [vmem:[#allocation6 + $0x40] sm:$0xff]
      %v1192 = vld [vmem:[#allocation6 + $0x48] sm:$0xff]
      %v1193 = vld [vmem:[#allocation6 + $0x50] sm:$0xff]
      %v1194 = vld [vmem:[#allocation6 + $0x58] sm:$0xff]
      %v1195 = vld [vmem:[#allocation6 + $0x60] sm:$0xff]
      %v1196 = vld [vmem:[#allocation6 + $0x68] sm:$0xff]
      %v1197 = vld [vmem:[#allocation6 + $0x70] sm:$0xff]
      %v1198 = vld [vmem:[#allocation6 + $0x78] sm:$0xff]
      %v1199 = vld [vmem:[%s6] sm:$0x1]
      %v1201 = vlaneseq
      %v1202 = vshrl.u32 %v1201, 7
      %v1203 = vsub.s32 0, %v1202
      %v1204 = vrot.slane %v1199, %v1203
      %1206 = vmatprep.subr.mxu0 0.0
      %1207 = vmatpush1.msra.mxu0 %v1183
      %1208 = vmatprep.subr.mxu0 0.0
      %1209 = vmatpush1.msra.mxu0 %v1184
      %1210 = vmatprep.subr.mxu0 0.0
      %1211 = vmatpush1.msra.mxu0 %v1185
      %1212 = vmatprep.subr.mxu0 0.0
      %1213 = vmatpush1.msra.mxu0 %v1186
      %1214 = vmatprep.subr.mxu0 0.0
      %1215 = vmatpush1.msra.mxu0 %v1187
      %1216 = vmatprep.subr.mxu0 0.0
      %1217 = vmatpush1.msra.mxu0 %v1188
      %1218 = vmatprep.subr.mxu0 0.0
      %1219 = vmatpush1.msra.mxu0 %v1189
      %1220 = vmatprep.subr.mxu0 0.0
      %1221 = vmatpush1.msra.mxu0 %v1190
      %1222 = vmatprep.subr.mxu0 0.0
      %1223 = vmatpush1.msra.mxu0 %v1191
      %1224 = vmatprep.subr.mxu0 0.0
      %1225 = vmatpush1.msra.mxu0 %v1192
      %1226 = vmatprep.subr.mxu0 0.0
      %1227 = vmatpush1.msra.mxu0 %v1193
      %1228 = vmatprep.subr.mxu0 0.0
      %1229 = vmatpush1.msra.mxu0 %v1194
      %1230 = vmatprep.subr.mxu0 0.0
      %1231 = vmatpush1.msra.mxu0 %v1195
      %1232 = vmatprep.subr.mxu0 0.0
      %1233 = vmatpush1.msra.mxu0 %v1196
      %1234 = vmatprep.subr.mxu0 0.0
      %1235 = vmatpush1.msra.mxu0 %v1197
      %1236 = vmatprep.subr.mxu0 0.0
      %1237 = vmatpush1.msra.mxu0 %v1198
      %1238 = vmatprep.subr.mxu0 0.0
      %1239 = vmatpush1.msra.mxu0 0.0
      %1240 = vmatprep.subr.mxu0 0.0
      %1241 = vmatpush1.msra.mxu0 0.0
      %1242 = vmatprep.subr.mxu0 0.0
      %1243 = vmatpush1.msra.mxu0 0.0
      %1244 = vmatprep.subr.mxu0 0.0
      %1245 = vmatpush1.msra.mxu0 0.0
      %1246 = vmatprep.subr.mxu0 0.0
      %1247 = vmatpush1.msra.mxu0 0.0
      %1248 = vmatprep.subr.mxu0 0.0
      %1249 = vmatpush1.msra.mxu0 0.0
      %1250 = vmatprep.subr.mxu0 0.0
      %1251 = vmatpush1.msra.mxu0 0.0
      %1252 = vmatprep.subr.mxu0 0.0
      %1253 = vmatpush1.msra.mxu0 0.0
      %1254 = vmatprep.subr.mxu0 0.0
      %1255 = vmatpush1.msra.mxu0 0.0
      %1256 = vmatprep.subr.mxu0 0.0
      %1257 = vmatpush1.msra.mxu0 0.0
      %1258 = vmatprep.subr.mxu0 0.0
      %1259 = vmatpush1.msra.mxu0 0.0
      %1260 = vmatprep.subr.mxu0 0.0
      %1261 = vmatpush1.msra.mxu0 0.0
      %1262 = vmatprep.subr.mxu0 0.0
      %1263 = vmatpush1.msra.mxu0 0.0
      %1264 = vmatprep.subr.mxu0 0.0
      %1265 = vmatpush1.msra.mxu0 0.0
      %1266 = vmatprep.subr.mxu0 0.0
      %1267 = vmatpush1.msra.mxu0 0.0
      %1268 = vmatprep.subr.mxu0 0.0
      %1269 = vmatpush1.msra.mxu0 0.0
      %1270 = vmatprep.mubr.f32.mxu0 0.0
      %1271 = vmatmul.mubr.f32.gmra.mrb[0].mxu0 %v1182
      %v1272 = vpop.f32.mrb[0].mxu0
      %v1273 = vadd.f32 %v1204, %v1272
      %v1274 = vpop.f32.mrb[0].mxu0
      %1275 = vdwg.mxu0
      %1276 = vst [vmem:[#allocation8] sm:$0xff] %v1273
    $region45: #{tpu_custom_call.1} parent=1 // pred_fallthru
      _
    // Predicated region
    $region46: #{tpu_custom_call.1} parent=1 // pred_check
      _
    $region47: #{tpu_custom_call.1} parent=1 // pred_check_branch
      %1278 = sbr.rel (0) target = $region49
    $region48: #{tpu_custom_call.1} parent=1 // pred_region
      %s1280 = ssub.s32 128, 128
      %1281 = vsyncadd [#allocation5], %s1280
      %s1283 = sshll.u32 [#allocation8], 4
      %s1284 = int_to_ptr.vmem [resolvable:$true] %s1283
      %1286 = dma.vmem_to_hbm [thread:$0]  %s1284, 128, %s7, [#allocation5]
    $region49: #{tpu_custom_call.1} parent=1 // pred_fallthru
      _
    // Predicated region
    $region50: #{tpu_custom_call.1} parent=1 // pred_check
      _
    $region51: #{tpu_custom_call.1} parent=1 // pred_check_branch
      %1288 = sbr.rel (0) target = $region53
    $region52: #{tpu_custom_call.1} parent=1 // pred_region
      %1289 = dma.done [#allocation5], 128
    $region53: #{tpu_custom_call.1} parent=1 // pred_fallthru
      _
    %1290 = vsyncpa [#allocation4], 1
    %1291 = vsyncpa [#allocation7], 1
    %1292 = vsyncpa [#allocation5], 1

</llo_original>
